<compile_context>
chip_gen: v7x
topology: tpu7x:2x2x1
jax: 0.10.0
libtpu: 0.0.40
codegen_flags: <defaults>
</compile_context>

<pallas_src>
import functools

import jax
import jax.numpy as jnp
from jax.experimental import pallas as pl
from jax.experimental.pallas import tpu as pltpu

LANES = 128
ACC_ROWS = 32                      # accumulator depth -> 4 independent vreg chains
MIN_TILE = ACC_ROWS * LANES        # host-side pad granularity (4096 elements)
BLOCK_BYTES = 4 * 1024 * 1024      # per-input HBM bytes per grid step
NUM_CORES = 2                      # leading "parallel" grid axis (v7x dual TC)


def _huber_kernel(yt_ref, yp_ref, out_ref, *,
                  delta, block_rows, valid_last, needs_mask):
    c = pl.program_id(0)           # core / parallel axis
    i = pl.program_id(1)           # row-block / reduction axis

    @pl.when(i == 0)
    def _init():
        out_ref[...] = jnp.zeros_like(out_ref)

    # Cast inside the kernel (HBM traffic stays at native dtype width).
    yt = yt_ref[...].astype(jnp.float32)
    yp = yp_ref[...].astype(jnp.float32)

    # Branch-free Huber: a = min(r, delta); loss = a * (r - 0.5 * a)
    #   r <  delta -> a = r     -> 0.5 * r^2
    #   r >= delta -> a = delta -> delta * (r - 0.5 * delta)
    r = jnp.abs(yt - yp)
    a = jnp.minimum(r, jnp.float32(delta))
    loss = a * (r - 0.5 * a)

    def accumulate(v):
        # (tm,128) -> (tm/32, 32, 128) -> sum over leading axis: pure VPU adds
        # into 4 independent (8,128) vreg chains held in the resident output.
        out_ref[...] += v.reshape(-1, ACC_ROWS, LANES).sum(axis=0)

    if needs_mask:
        # Only the LAST step of a core can contain invalid elements
        # (ragged tail of the real data, host pad, or a clamped out-of-range
        # duplicate block). Keep the steady state mask-free.
        is_last = i == pl.num_programs(1) - 1

        @pl.when(is_last)
        def _tail():
            if len(valid_last) == 1:
                vcount = jnp.int32(valid_last[0])
            else:
                vcount = jnp.where(c == 0,
                                   jnp.int32(valid_last[0]),
                                   jnp.int32(valid_last[1]))
            row = jax.lax.broadcasted_iota(jnp.int32, (block_rows, LANES), 0)
            lane = jax.lax.broadcasted_iota(jnp.int32, (block_rows, LANES), 1)
            local = row * LANES + lane            # block-local flat index
            accumulate(jnp.where(local < vcount, loss, 0.0))

        @pl.when(i != pl.num_programs(1) - 1)
        def _body():
            accumulate(loss)
    else:
        accumulate(loss)


def huber_loss(y_true, y_pred, delta=1.0, block_bytes=BLOCK_BYTES):
    assert y_true.shape == y_pred.shape
    n_valid = int(y_true.size)
    assert n_valid > 0

    yt = jnp.ravel(y_true)
    yp = jnp.ravel(y_pred)

    # Minimal pad to a multiple of the (32,128) accumulator tile so the 2-D
    # view and in-kernel reshape are well-formed. Padding is zeros -> zero loss.
    padded = pl.cdiv(n_valid, MIN_TILE) * MIN_TILE
    pad = padded - n_valid
    if pad:
        yt = jnp.pad(yt, (0, pad))
        yp = jnp.pad(yp, (0, pad))

    rows = padded // LANES                       # multiple of ACC_ROWS (32)
    yt2 = yt.reshape(rows, LANES)
    yp2 = yp.reshape(rows, LANES)

    # Byte-normalized tile: ~block_bytes of input per operand per grid step,
    # independent of dtype width. Always a multiple of 32 rows.
    itemsize = max(yt2.dtype.itemsize, yp2.dtype.itemsize)
    tm = max(ACC_ROWS,
             (block_bytes // (LANES * itemsize)) // ACC_ROWS * ACC_ROWS)
    tm = min(tm, rows)

    nb = pl.cdiv(rows, tm)                       # total row-blocks
    num_cores = NUM_CORES if nb >= NUM_CORES else 1
    bpc = pl.cdiv(nb, num_cores)                 # blocks per core

    # Interleaved block assignment: core c handles blocks c, c+num_cores, ...
    # so the ragged real block (nb-1) and the single possible out-of-range
    # block (nb, when nb is odd) both land on their core's LAST step.
    valid_last = []
    for ci in range(num_cores):
        last_blk = num_cores * (bpc - 1) + ci
        start = last_blk * tm * LANES            # Python int, no overflow
        valid_last.append(int(max(0, min(n_valid - start, tm * LANES))))
    needs_mask = any(v < tm * LANES for v in valid_last)

    clamp_needed = num_cores * bpc > nb          # only when nb is odd
    last_blk_idx = nb - 1

    def in_map(ci, ii):
        blk = ci + num_cores * ii
        if clamp_needed:
            # Keep the DMA in range; the duplicated block is fully masked.
            blk = jnp.minimum(blk, last_blk_idx)
        return (blk, 0)

    kernel = functools.partial(
        _huber_kernel,
        delta=float(delta),
        block_rows=tm,
        valid_last=tuple(valid_last),
        needs_mask=bool(needs_mask),
    )

    partials = pl.pallas_call(
        kernel,
        out_shape=jax.ShapeDtypeStruct((num_cores, ACC_ROWS, LANES),
                                       jnp.float32),
        grid_spec=pltpu.PrefetchScalarGridSpec(
            num_scalar_prefetch=0,
            grid=(num_cores, bpc),
            in_specs=[
                pl.BlockSpec((tm, LANES), in_map),
                pl.BlockSpec((tm, LANES), in_map),
            ],
            # Per-core resident accumulator block; written back once per core.
            out_specs=pl.BlockSpec((None, ACC_ROWS, LANES),
                                   lambda ci, ii: (ci, 0, 0)),
        ),
        compiler_params=pltpu.CompilerParams(
            dimension_semantics=("parallel", "arbitrary"),
            # 2 inputs x 2 buffers x ~4 MiB = ~16 MiB; explicit limit so the
            # working set also fits past v5e's 16 MiB scoped-VMEM default.
            vmem_limit_bytes=40 * 1024 * 1024,
        ),
    )(yt2, yp2)

    # Final cross-lane/sublane reduction + mean in the wrapper (tiny XLA op);
    # avoids any shared scalar output between the two TensorCores.
    return jnp.sum(partials) / jnp.float32(n_valid)


def huber_loss_ref(y_true, y_pred, delta=1.0):
    r = jnp.abs(y_true.astype(jnp.float32) - y_pred.astype(jnp.float32))
    squared = 0.5 * r**2
    linear = delta * (r - 0.5 * delta)
    return jnp.mean(jnp.where(r < delta, squared, linear))


if __name__ == "__main__":
    key = jax.random.PRNGKey(0)
    k1, k2, k3, k4, k5, k6 = jax.random.split(key, 6)

    # Primary case: NCHW [2, 4, 16, 16], matching the PyTorch module's usage.
    shape = (2, 4, 16, 16)
    y_true = jax.random.normal(k1, shape, dtype=jnp.float32)
    y_pred = jax.random.normal(k2, shape, dtype=jnp.float32) * 1.5
    out = jax.block_until_ready(huber_loss(y_true, y_pred, delta=1.0))
    ref = huber_loss_ref(y_true, y_pred, delta=1.0)
    assert jnp.allclose(out, ref, rtol=1e-5, atol=1e-6), (out, ref)

    # Odd size: exercises the host pad + last-step tail mask.
    a = jax.random.normal(k3, (3, 5, 7), dtype=jnp.float32)
    b = jax.random.normal(k4, (3, 5, 7), dtype=jnp.float32) * 2.0
    out2 = jax.block_until_ready(huber_loss(a, b, delta=2.0))
    ref2 = huber_loss_ref(a, b, delta=2.0)
    assert jnp.allclose(out2, ref2, rtol=1e-5, atol=1e-6), (out2, ref2)

    # Multi-block, odd block count: exercises the dual-core split, the
    # clamped out-of-range block, and the ragged-tail mask (tiny block_bytes
    # forces several grid steps even at this small size).
    c1 = jax.random.normal(k5, (5, 2333), dtype=jnp.float32)
    c2 = jax.random.normal(k6, (5, 2333), dtype=jnp.float32) * 1.3
    out3 = jax.block_until_ready(huber_loss(c1, c2, delta=0.7,
                                            block_bytes=16 * 1024))
    ref3 = huber_loss_ref(c1, c2, delta=0.7)
    assert jnp.allclose(out3, ref3, rtol=1e-5, atol=1e-6), (out3, ref3)

    print("KERNEL_OK")
</pallas_src>

<mosaic_0001>
module attributes {stable_mosaic.version = 11 : i64} {
  func.func @_huber_kernel(%arg0: i32, %arg1: i32, %arg2: memref<32x128xf32, #tpu.memory_space<vmem>>, %arg3: memref<32x128xf32, #tpu.memory_space<vmem>>, %arg4: memref<1x32x128xf32, #tpu.memory_space<vmem>>) attributes {dimension_semantics = [#tpu.dimension_semantics<parallel>, #tpu.dimension_semantics<arbitrary>], iteration_bounds = array<i64: 1, 1>, scalar_prefetch = 0 : i64, scratch_operands = 0 : i64, tpu.core_type = #tpu.core_type<tc>, window_params = [{transform_indices = @transform_0, window_bounds = array<i64: 32, 128>}, {transform_indices = @transform_1, window_bounds = array<i64: 32, 128>}, {transform_indices = @transform_2, window_bounds = array<i64: 1, 32, 128>}]} {
    %c0_i32 = arith.constant 0 : i32
    %0 = arith.cmpi eq, %arg1, %c0_i32 : i32
    %1 = arith.extui %0 : i1 to i32
    %c0_i32_0 = arith.constant 0 : i32
    %2 = arith.cmpi ne, %1, %c0_i32_0 : i32
    scf.if %2 {
      %cst_9 = arith.constant 0.000000e+00 : f32
      %19 = vector.broadcast %cst_9 : f32 to vector<32x128xf32>
      %c0_10 = arith.constant 0 : index
      %c0_11 = arith.constant 0 : index
      %c0_12 = arith.constant 0 : index
      %20 = vector.load %arg4[%c0_10, %c0_11, %c0_12] : memref<1x32x128xf32, #tpu.memory_space<vmem>>, vector<1x32x128xf32>
      %21 = vector.shape_cast %20 : vector<1x32x128xf32> to vector<32x128xf32>
      %22 = vector.shape_cast %19 : vector<32x128xf32> to vector<1x32x128xf32>
      tpu.vector_store %arg4[%c0_10, %c0_11, %c0_12], %22 {strides = array<i32>} : memref<1x32x128xf32, #tpu.memory_space<vmem>>, vector<1x32x128xf32>,
    } else {
    }
    %c0 = arith.constant 0 : index
    %c0_1 = arith.constant 0 : index
    %3 = vector.load %arg2[%c0, %c0_1] : memref<32x128xf32, #tpu.memory_space<vmem>>, vector<32x128xf32>
    %c0_2 = arith.constant 0 : index
    %c0_3 = arith.constant 0 : index
    %4 = vector.load %arg3[%c0_2, %c0_3] : memref<32x128xf32, #tpu.memory_space<vmem>>, vector<32x128xf32>
    %5 = arith.subf %3, %4 : vector<32x128xf32>
    %6 = math.absf %5 : vector<32x128xf32>
    %cst = arith.constant 1.000000e+00 : f32
    %7 = vector.broadcast %cst : f32 to vector<32x128xf32>
    %8 = arith.minimumf %6, %7 : vector<32x128xf32>
    %cst_4 = arith.constant 5.000000e-01 : f32
    %9 = vector.broadcast %cst_4 : f32 to vector<32x128xf32>
    %10 = arith.mulf %9, %8 : vector<32x128xf32>
    %11 = arith.subf %6, %10 : vector<32x128xf32>
    %12 = arith.mulf %8, %11 : vector<32x128xf32>
    %c0_i32_5 = arith.constant 0 : i32
    %13 = arith.cmpi eq, %arg1, %c0_i32_5 : i32
    %14 = arith.extui %13 : i1 to i32
    %c0_i32_6 = arith.constant 0 : i32
    %15 = arith.cmpi ne, %14, %c0_i32_6 : i32
    scf.if %15 {
      %19 = tpu.iota {dimensions = array<i32: 0>} : vector<32x128xi32>
      %20 = tpu.iota {dimensions = array<i32: 1>} : vector<32x128xi32>
      %c128_i32 = arith.constant 128 : i32
      %21 = vector.broadcast %c128_i32 : i32 to vector<32x128xi32>
      %22 = arith.muli %19, %21 : vector<32x128xi32>
      %23 = arith.addi %22, %20 : vector<32x128xi32>
      %c2048_i32 = arith.constant 2048 : i32
      %24 = vector.broadcast %c2048_i32 : i32 to vector<32x128xi32>
      %25 = arith.cmpi slt, %23, %24 : vector<32x128xi32>
      %cst_9 = arith.constant 0.000000e+00 : f32
      %26 = vector.broadcast %cst_9 : f32 to vector<32x128xf32>
      %27 = arith.select %25, %12, %26 : vector<32x128xi1>, vector<32x128xf32>
      %c0_10 = arith.constant 0 : index
      %c0_11 = arith.constant 0 : index
      %c0_12 = arith.constant 0 : index
      %28 = vector.load %arg4[%c0_10, %c0_11, %c0_12] : memref<1x32x128xf32, #tpu.memory_space<vmem>>, vector<1x32x128xf32>
      %29 = vector.shape_cast %28 : vector<1x32x128xf32> to vector<32x128xf32>
      %30 = vector.shape_cast %27 : vector<32x128xf32> to vector<1x32x128xf32>
      %cst_13 = arith.constant dense<0.000000e+00> : vector<32x128xf32>
      %31 = vector.multi_reduction <add>, %30, %cst_13 [0] : vector<1x32x128xf32> to vector<32x128xf32>
      %32 = arith.addf %29, %31 : vector<32x128xf32>
      %c0_14 = arith.constant 0 : index
      %c0_15 = arith.constant 0 : index
      %c0_16 = arith.constant 0 : index
      %33 = vector.load %arg4[%c0_14, %c0_15, %c0_16] : memref<1x32x128xf32, #tpu.memory_space<vmem>>, vector<1x32x128xf32>
      %34 = vector.shape_cast %33 : vector<1x32x128xf32> to vector<32x128xf32>
      %35 = vector.shape_cast %32 : vector<32x128xf32> to vector<1x32x128xf32>
      tpu.vector_store %arg4[%c0_14, %c0_15, %c0_16], %35 {strides = array<i32>} : memref<1x32x128xf32, #tpu.memory_space<vmem>>, vector<1x32x128xf32>,
    } else {
    }
    %c0_i32_7 = arith.constant 0 : i32
    %16 = arith.cmpi ne, %arg1, %c0_i32_7 : i32
    %17 = arith.extui %16 : i1 to i32
    %c0_i32_8 = arith.constant 0 : i32
    %18 = arith.cmpi ne, %17, %c0_i32_8 : i32
    scf.if %18 {
      %c0_9 = arith.constant 0 : index
      %c0_10 = arith.constant 0 : index
      %c0_11 = arith.constant 0 : index
      %19 = vector.load %arg4[%c0_9, %c0_10, %c0_11] : memref<1x32x128xf32, #tpu.memory_space<vmem>>, vector<1x32x128xf32>
      %20 = vector.shape_cast %19 : vector<1x32x128xf32> to vector<32x128xf32>
      %21 = vector.shape_cast %12 : vector<32x128xf32> to vector<1x32x128xf32>
      %cst_12 = arith.constant dense<0.000000e+00> : vector<32x128xf32>
      %22 = vector.multi_reduction <add>, %21, %cst_12 [0] : vector<1x32x128xf32> to vector<32x128xf32>
      %23 = arith.addf %20, %22 : vector<32x128xf32>
      %c0_13 = arith.constant 0 : index
      %c0_14 = arith.constant 0 : index
      %c0_15 = arith.constant 0 : index
      %24 = vector.load %arg4[%c0_13, %c0_14, %c0_15] : memref<1x32x128xf32, #tpu.memory_space<vmem>>, vector<1x32x128xf32>
      %25 = vector.shape_cast %24 : vector<1x32x128xf32> to vector<32x128xf32>
      %26 = vector.shape_cast %23 : vector<32x128xf32> to vector<1x32x128xf32>
      tpu.vector_store %arg4[%c0_13, %c0_14, %c0_15], %26 {strides = array<i32>} : memref<1x32x128xf32, #tpu.memory_space<vmem>>, vector<1x32x128xf32>,
    } else {
    }
    return
  }
  func.func @transform_0(%arg0: i32, %arg1: i32) -> (i32, i32) {
    %c1_i32 = arith.constant 1 : i32
    %0 = arith.muli %c1_i32, %arg1 : i32
    %1 = arith.addi %arg0, %0 : i32
    %c0_i32 = arith.constant 0 : i32
    %c0_i32_0 = arith.constant 0 : i32
    return %1, %c0_i32 : i32, i32
  }
  func.func @transform_1(%arg0: i32, %arg1: i32) -> (i32, i32) {
    %c1_i32 = arith.constant 1 : i32
    %0 = arith.muli %c1_i32, %arg1 : i32
    %1 = arith.addi %arg0, %0 : i32
    %c0_i32 = arith.constant 0 : i32
    %c0_i32_0 = arith.constant 0 : i32
    return %1, %c0_i32 : i32, i32
  }
  func.func @transform_2(%arg0: i32, %arg1: i32) -> (i32, i32, i32) {
    %c0_i32 = arith.constant 0 : i32
    %c0_i32_0 = arith.constant 0 : i32
    %c0_i32_1 = arith.constant 0 : i32
    return %arg0, %c0_i32, %c0_i32_0 : i32, i32, i32
  }
}

</mosaic_0001>

<llo_original>
// kernel: tpu_custom_call.1
$region0: #{tpu_custom_call.1}
  #allocation0 [shape = 'u32[]', space=smem, size = 0x4, offset = 0x4, fixed_abs, tag = 'smem constant byte address 0x4 - core index']
  #allocation1 [shape = 'u32[144,128]{1,0:T(1,128)}', space=vmem, size = 0x12000, scoped, tag = 'internal scratch']
  %s0 = inlined_call_operand.hbm [shape: f32[32,128], index: 0, kind: input, shape index: {}]
  %s1 = inlined_call_operand.hbm [shape: f32[32,128], index: 1, kind: input, shape index: {}]
  %s2 = inlined_call_operand.hbm [shape: f32[1,32,128], index: 2, kind: output, shape index: {}]
  %s3 = sld [smem:[#allocation0]]
  $region38: #{tpu_custom_call.1} parent=0
    _
  %s5 = ssub.s32 1, %s3
  %s6 = scalar_select 0, %s5, %s3
  $region1: #{tpu_custom_call.1} parent=0
    #allocation2 [shape = 'u8[16384]{0}', space=vmem, size = 0x4000, scoped, tag = 'input window, operand 0, single buffered']
    #allocation3 [shape = 's32[1]{0}', space=sflag, size = 0x4, scoped, tag = 'scoped memory for tpu_custom_call.1']
    #allocation4 [shape = 's32[1]{0}', space=sflag, size = 0x4, scoped, tag = 'scoped memory for tpu_custom_call.1']
    #allocation5 [shape = 'u8[16384]{0}', space=vmem, size = 0x4000, scoped, tag = 'input window, operand 1, single buffered']
    #allocation6 [shape = 's32[1]{0}', space=sflag, size = 0x4, scoped, tag = 'scoped memory for tpu_custom_call.1']
    #allocation7 [shape = 'u8[16384]{0}', space=vmem, size = 0x4000, scoped, tag = 'output window, operand 0, single buffered']
    %7 = vsyncpa [#allocation3], 0
    %8 = vsyncpa [#allocation6], 0
    %9 = vsyncpa [#allocation4], 0
    // Predicated region
    $region2: #{tpu_custom_call.1} parent=1 // pred_check
      _
    $region3: #{tpu_custom_call.1} parent=1 // pred_check_branch
      %11 = sbr.rel (0) target = $region5
    $region4: #{tpu_custom_call.1} parent=1 // pred_region
      %s12 = sadd.s32 0, 0
      %s13 = smul.u32 4, %s12
      %s15 = ssub.s32 512, 512
      %16 = vsyncadd [#allocation3], %s15
      %s17 = smul.addr %s13, 128
      %s18 = scalar_lea.hbm %s0, %s17
      %s19 = sshll.u32 [#allocation2], 4
      %s20 = int_to_ptr.vmem [resolvable:$true] %s19
      %25 = dma.hbm_to_vmem [thread:$0]  %s18, 512, %s20, [#allocation3], 128, 128, 8
    $region5: #{tpu_custom_call.1} parent=1 // pred_fallthru
      _
    // Predicated region
    $region6: #{tpu_custom_call.1} parent=1 // pred_check
      _
    $region7: #{tpu_custom_call.1} parent=1 // pred_check_branch
      %27 = sbr.rel (0) target = $region9
    $region8: #{tpu_custom_call.1} parent=1 // pred_region
      %s28 = sadd.s32 0, 0
      %s29 = smul.u32 4, %s28
      %s31 = ssub.s32 512, 512
      %32 = vsyncadd [#allocation6], %s31
      %s33 = smul.addr %s29, 128
      %s34 = scalar_lea.hbm %s1, %s33
      %s35 = sshll.u32 [#allocation5], 4
      %s36 = int_to_ptr.vmem [resolvable:$true] %s35
      %41 = dma.hbm_to_vmem [thread:$0]  %s34, 512, %s36, [#allocation6], 128, 128, 8
    $region9: #{tpu_custom_call.1} parent=1 // pred_fallthru
      _
    // Predicated region
    $region10: #{tpu_custom_call.1} parent=1 // pred_check
      _
    $region11: #{tpu_custom_call.1} parent=1 // pred_check_branch
      %43 = sbr.rel (0) target = $region13
    $region12: #{tpu_custom_call.1} parent=1 // pred_region
      %44 = dma.done [#allocation3], 512
    $region13: #{tpu_custom_call.1} parent=1 // pred_fallthru
      _
    // Predicated region
    $region14: #{tpu_custom_call.1} parent=1 // pred_check
      _
    $region15: #{tpu_custom_call.1} parent=1 // pred_check_branch
      %46 = sbr.rel (0) target = $region17
    $region16: #{tpu_custom_call.1} parent=1 // pred_region
      %47 = dma.done [#allocation6], 512
    $region17: #{tpu_custom_call.1} parent=1 // pred_fallthru
      _
    %s48 = sadd.s32 0, 0
    %s49 = smul.u32 4, %s48
    %s50 = sadd.s32 0, 0
    %s51 = smul.u32 4, %s50
    %p52 = scmp.eq.s32.totalorder 0, 0
    // Predicated region
    $region18: #{tpu_custom_call.1} parent=1 // pred_check
      %p53 = pneg %p52
    $region19: #{tpu_custom_call.1} parent=1 // pred_check_branch
      %55 = sbr.rel (%p53) target = $region21
    $region20: #{tpu_custom_call.1} parent=1 // pred_region
      %56 = vst [vmem:[#allocation7] sm:$0xff] 0.0
      %57 = vst [vmem:[#allocation7 + $0x8] sm:$0xff] 0.0
      %58 = vst [vmem:[#allocation7 + $0x10] sm:$0xff] 0.0
      %59 = vst [vmem:[#allocation7 + $0x18] sm:$0xff] 0.0
    $region21: #{tpu_custom_call.1} parent=1 // pred_fallthru
      _
    %v60 = vld [vmem:[#allocation2] sm:$0xff]
    %v61 = vld [vmem:[#allocation2 + $0x8] sm:$0xff]
    %v62 = vld [vmem:[#allocation2 + $0x10] sm:$0xff]
    %v63 = vld [vmem:[#allocation2 + $0x18] sm:$0xff]
    %v64 = vld [vmem:[#allocation5] sm:$0xff]
    %v65 = vld [vmem:[#allocation5 + $0x8] sm:$0xff]
    %v66 = vld [vmem:[#allocation5 + $0x10] sm:$0xff]
    %v67 = vld [vmem:[#allocation5 + $0x18] sm:$0xff]
    %v68 = vsub.f32 %v60, %v64
    %v69 = vsub.f32 %v61, %v65
    %v70 = vsub.f32 %v62, %v66
    %v71 = vsub.f32 %v63, %v67
    %v72 = vand.u32 2147483647, %v68
    %v73 = vand.u32 2147483647, %v69
    %v74 = vand.u32 2147483647, %v70
    %v75 = vand.u32 2147483647, %v71
    %v76 = vmin.f32 %v72, 1.0
    %v77 = vmin.f32 %v73, 1.0
    %v78 = vmin.f32 %v74, 1.0
    %v79 = vmin.f32 %v75, 1.0
    %v80 = vmul.f32 %v76, 0.5
    %v81 = vmul.f32 %v77, 0.5
    %v82 = vmul.f32 %v78, 0.5
    %v83 = vmul.f32 %v79, 0.5
    %v84 = vsub.f32 %v72, %v80
    %v85 = vsub.f32 %v73, %v81
    %v86 = vsub.f32 %v74, %v82
    %v87 = vsub.f32 %v75, %v83
    %v88 = vmul.f32 %v76, %v84
    %v89 = vmul.f32 %v77, %v85
    %v90 = vmul.f32 %v78, %v86
    %v91 = vmul.f32 %v79, %v87
    // Predicated region
    $region22: #{tpu_custom_call.1} parent=1 // pred_check
      %p92 = pneg %p52
    $region23: #{tpu_custom_call.1} parent=1 // pred_check_branch
      %94 = sbr.rel (%p92) target = $region25
    $region24: #{tpu_custom_call.1} parent=1 // pred_region
      %v95 = vlaneseq
      %v96 = vshrl.u32 %v95, 7
      %v97 = vadd.s32 %v96, 8
      %v98 = vadd.s32 %v96, 16
      %v99 = vadd.s32 %v96, 24
      %v100 = vlaneseq
      %v101 = vand.u32 %v100, 127
      %v102 = vmul.u32 %v96, 128
      %v103 = vmul.u32 %v97, 128
      %v104 = vmul.u32 %v98, 128
      %v105 = vmul.u32 %v99, 128
      %v106 = vadd.s32 %v102, %v101
      %v107 = vadd.s32 %v103, %v101
      %v108 = vadd.s32 %v104, %v101
      %v109 = vadd.s32 %v105, %v101
      %vm110 = vcmp.lt.s32.totalorder %v106, 2048
      %vm111 = vcmp.lt.s32.totalorder %v107, 2048
      %vm112 = vcmp.lt.s32.totalorder %v108, 2048
      %vm113 = vcmp.lt.s32.totalorder %v109, 2048
      %v114 = vsel %vm110, %v88, 0.0
      %v115 = vsel %vm111, %v89, 0.0
      %v116 = vsel %vm112, %v90, 0.0
      %v117 = vsel %vm113, %v91, 0.0
      %v118 = vld [vmem:[#allocation7] sm:$0xff]
      %v119 = vld [vmem:[#allocation7 + $0x8] sm:$0xff]
      %v120 = vld [vmem:[#allocation7 + $0x10] sm:$0xff]
      %v121 = vld [vmem:[#allocation7 + $0x18] sm:$0xff]
      %v122 = vadd.f32 %v114, 0.0
      %v123 = vadd.f32 %v115, 0.0
      %v124 = vadd.f32 %v116, 0.0
      %v125 = vadd.f32 %v117, 0.0
      %v126 = vadd.f32 %v118, %v122
      %v127 = vadd.f32 %v119, %v123
      %v128 = vadd.f32 %v120, %v124
      %v129 = vadd.f32 %v121, %v125
      %130 = vst [vmem:[#allocation7] sm:$0xff] %v126
      %131 = vst [vmem:[#allocation7 + $0x8] sm:$0xff] %v127
      %132 = vst [vmem:[#allocation7 + $0x10] sm:$0xff] %v128
      %133 = vst [vmem:[#allocation7 + $0x18] sm:$0xff] %v129
    $region25: #{tpu_custom_call.1} parent=1 // pred_fallthru
      _
    %p134 = scmp.ne.s32.totalorder 0, 0
    // Predicated region
    $region26: #{tpu_custom_call.1} parent=1 // pred_check
      %p135 = pneg %p134
    $region27: #{tpu_custom_call.1} parent=1 // pred_check_branch
      %137 = sbr.rel (%p135) target = $region29
    $region28: #{tpu_custom_call.1} parent=1 // pred_region
      %v138 = vld [vmem:[#allocation7] sm:$0xff]
      %v139 = vld [vmem:[#allocation7 + $0x8] sm:$0xff]
      %v140 = vld [vmem:[#allocation7 + $0x10] sm:$0xff]
      %v141 = vld [vmem:[#allocation7 + $0x18] sm:$0xff]
      %v142 = vadd.f32 %v88, 0.0
      %v143 = vadd.f32 %v89, 0.0
      %v144 = vadd.f32 %v90, 0.0
      %v145 = vadd.f32 %v91, 0.0
      %v146 = vadd.f32 %v138, %v142
      %v147 = vadd.f32 %v139, %v143
      %v148 = vadd.f32 %v140, %v144
      %v149 = vadd.f32 %v141, %v145
      %150 = vst [vmem:[#allocation7] sm:$0xff] %v146
      %151 = vst [vmem:[#allocation7 + $0x8] sm:$0xff] %v147
      %152 = vst [vmem:[#allocation7 + $0x10] sm:$0xff] %v148
      %153 = vst [vmem:[#allocation7 + $0x18] sm:$0xff] %v149
    $region29: #{tpu_custom_call.1} parent=1 // pred_fallthru
      _
    // Predicated region
    $region30: #{tpu_custom_call.1} parent=1 // pred_check
      _
    $region31: #{tpu_custom_call.1} parent=1 // pred_check_branch
      %155 = sbr.rel (0) target = $region33
    $region32: #{tpu_custom_call.1} parent=1 // pred_region
      %s157 = ssub.s32 512, 512
      %158 = vsyncadd [#allocation4], %s157
      %s159 = sshll.u32 [#allocation7], 4
      %s160 = int_to_ptr.vmem [resolvable:$true] %s159
      %165 = dma.vmem_to_hbm [thread:$0]  %s160, 512, %s2, [#allocation4], 128, 128, 8
    $region33: #{tpu_custom_call.1} parent=1 // pred_fallthru
      _
    // Predicated region
    $region34: #{tpu_custom_call.1} parent=1 // pred_check
      _
    $region35: #{tpu_custom_call.1} parent=1 // pred_check_branch
      %167 = sbr.rel (0) target = $region37
    $region36: #{tpu_custom_call.1} parent=1 // pred_region
      %168 = dma.done [#allocation4], 512
    $region37: #{tpu_custom_call.1} parent=1 // pred_fallthru
      _
    %169 = vsyncpa [#allocation3], 1
    %170 = vsyncpa [#allocation6], 1
    %171 = vsyncpa [#allocation4], 1

</llo_original>
